<compile_context>
chip_gen: v5e
topology: v5e:2x2
jax: 0.10.0
libtpu: 0.0.40
codegen_flags: <defaults>
</compile_context>

<pallas_src>
import functools
import numpy as np
import jax
import jax.numpy as jnp
from jax import lax
from jax.experimental import pallas as pl
from jax.experimental.pallas import tpu as pltpu

# ----------------------------- model dimensions (small) -----------------------------
VOCAB = 64      # synthetic phoneme inventory (ArticulatoryCombinedTextFrontend analog)
F     = 64      # articulatory feature dim per phone (padded 62 -> 64 for lane layout)
H     = 32      # FastSpeech2 hidden dim
E     = 64      # utterance (speaker) embedding dim
MEL   = 80      # mel bins
C     = 32      # HiFiGAN channels
UPS   = (4, 4)  # HiFiGAN upsample rates (kernel = 2*rate, padding = rate//2)

CDT      = jnp.bfloat16   # HBM/VMEM activation & weight dtype (f32 accumulate in-kernel)
MAX_TILE = 1024           # time-tile upper bound for the tiled (HiFiGAN) kernels


def _cdiv(a, b):
    return (a + b - 1) // b


def _round_up(a, b):
    return _cdiv(a, b) * b


def _pick_tile(t, hb):
    tile = min(MAX_TILE, _round_up(max(t, 1), hb))
    # halo block index arithmetic below requires TILE % HB == 0 (review concern).
    assert tile % hb == 0 and MAX_TILE % hb == 0
    return tile


# ----------------------------- in-kernel helpers -------------------------------------
def _lrelu(x):
    return jnp.where(x >= 0, x, x * 0.1)


def _same_conv(x, w, b, k, d=1):
    """'same' Conv1d on a full-length VMEM-resident activation (grid=1 kernels).
    Builds the (N, k*Cin) window with per-layer zero padding and issues ONE MXU dot
    (all k taps fused into the contraction dim)."""
    n, cin = x.shape
    pad = d * (k - 1) // 2
    z = jnp.zeros((pad, cin), x.dtype)
    xp = jnp.concatenate([z, x, z], axis=0)
    win = jnp.concatenate([xp[j * d:j * d + n, :] for j in range(k)], axis=1)
    return jnp.dot(win, w, preferred_element_type=jnp.float32) + b


def _valid_conv(x, w, b, k, d):
    """'valid' Conv1d over an already-haloed window (tiled kernels); output has
    (k-1)*d fewer rows; all k taps fused into one MXU dot."""
    n = x.shape[0] - (k - 1) * d
    win = jnp.concatenate([x[j * d:j * d + n, :] for j in range(k)], axis=1)
    return jnp.dot(win, w, preferred_element_type=jnp.float32) + b


# ----------------------------- kernel 1: fused FastSpeech2 encoder -------------------
def _encoder_kernel(x_ref, u_ref, wi, bi, wc1, bc1, wc2, bc2, wvp, bvp, wvo, bvo,
                    pew, peb, h_ref, vpo_ref):
    x = x_ref[...]                                                        # (Tp, F) bf16
    h0 = jnp.maximum(jnp.dot(x, wi[...], preferred_element_type=jnp.float32) + bi[...], 0.0)
    h1 = jnp.maximum(_same_conv(h0.astype(CDT), wc1[...], bc1[...], 3), 0.0)
    h2 = jnp.maximum(_same_conv(h1.astype(CDT), wc2[...], bc2[...], 3), 0.0) + u_ref[...]
    # fused duration / pitch / energy predictors: one conv (N=3H) + one block-diag proj.
    vp = jnp.maximum(_same_conv(h2.astype(CDT), wvp[...], bvp[...], 3), 0.0)
    vpo = jnp.dot(vp.astype(CDT), wvo[...], preferred_element_type=jnp.float32) + bvo[...]
    # K=1 pitch / energy "embeddings" are plain VPU broadcast multiply-adds.
    pe = pew[...]                                                         # (2, H) f32
    hc = h2 + vpo[:, 1:2] * pe[0:1, :] + vpo[:, 2:3] * pe[1:2, :] + peb[...]
    h_ref[...] = hc.astype(h_ref.dtype)
    vpo_ref[...] = vpo.astype(vpo_ref.dtype)


# ----------------------------- kernel 2: fused FastSpeech2 decoder -------------------
def _decoder_kernel(h_ref, wd1, bd1, wd2, bd2, wm, bm, mel_ref):
    h = h_ref[...]                                                        # (Tm, H) bf16
    d1 = jnp.maximum(_same_conv(h, wd1[...], bd1[...], 3), 0.0).astype(CDT)
    d2 = jnp.maximum(_same_conv(d1, wd2[...], bd2[...], 3), 0.0).astype(CDT)
    mel = jnp.dot(d2, wm[...], preferred_element_type=jnp.float32) + bm[...]
    mel_ref[...] = mel.astype(mel_ref.dtype)


# ----------------------------- kernels 3/5: polyphase upsampler (+conv_pre) ----------
def _up_kernel(*refs, TILE, R, T_in, include_pre):
    if include_pre:
        x_ref, h_ref, wpre, bpre, wup, bup, o_ref = refs
    else:
        x_ref, h_ref, wup, bup, o_ref = refs
    i = pl.program_id(0)
    g0 = i * TILE - R                       # global (input-rate) index of window row 0
    xw = jnp.concatenate([x_ref[...], h_ref[...]], axis=0)       # (TILE+2R, Cin) bf16
    off = 0
    if include_pre:                         # HiFiGAN conv_pre (k=7) fused in
        xw = _valid_conv(xw, wpre[...], bpre[...], 7, 1)         # f32, trims 3 / side
        off += 3
        g = g0 + off + lax.broadcasted_iota(jnp.int32, (xw.shape[0], 1), 0)
        xw = jnp.where((g >= 0) & (g < T_in), xw, 0.0).astype(CDT)
    # polyphase ConvTranspose1d == 3-tap conv producing r*C lanes (lane-dense output)
    y = _valid_conv(_lrelu(xw), wup[...], bup[...], 3, 1)        # trims 1 / side
    off += 1
    start = R - off
    o_ref[...] = y[start:start + TILE, :].astype(o_ref.dtype)


def _up_call(x, w_up, b_up, r, pre=None):
    t, cin = x.shape
    R, HB = 4, 8
    tile = _pick_tile(t, HB)
    n = _cdiv(t, tile)
    rc = w_up.shape[1]
    cph = rc // r
    # single halo-padded layout per fused kernel (rows [R, R+t) hold x, zeros elsewhere)
    p_in = jnp.zeros((n * tile + HB, cin), CDT).at[R:R + t].set(x.astype(CDT))
    args = [p_in, p_in]
    in_specs = [pl.BlockSpec((tile, cin), lambda i: (i, 0)),
                pl.BlockSpec((HB, cin), lambda i: ((i + 1) * (tile // HB), 0))]
    if pre is not None:
        args += [pre[0], pre[1]]
        in_specs += [pl.BlockSpec(pre[0].shape, lambda i: (0, 0)),
                     pl.BlockSpec(pre[1].shape, lambda i: (0, 0))]
    args += [w_up, b_up]
    in_specs += [pl.BlockSpec(w_up.shape, lambda i: (0, 0)),
                 pl.BlockSpec(b_up.shape, lambda i: (0, 0))]
    out = pl.pallas_call(
        functools.partial(_up_kernel, TILE=tile, R=R, T_in=t, include_pre=pre is not None),
        out_shape=jax.ShapeDtypeStruct((n * tile, rc), CDT),
        grid=(n,),
        in_specs=in_specs,
        out_specs=pl.BlockSpec((tile, rc), lambda i: (i, 0)),
        compiler_params=pltpu.CompilerParams(dimension_semantics=("parallel",)),
    )(*args)
    # polyphase interleave [T, r*C] -> [T*r, C]: one cheap XLA pass between kernels
    return out[:t].reshape(t, r, cph).reshape(t * r, cph)


# ----------------------------- kernels 4/6: fused ResBlocks (+conv_post) -------------
def _rb_kernel(*refs, TILE, R, T_out, include_post):
    if include_post:
        (x_ref, h_ref, w11, b11, w12, b12, w31, b31, w32, b32, wp, bp, o_ref) = refs
    else:
        (x_ref, h_ref, w11, b11, w12, b12, w31, b31, w32, b32, o_ref) = refs
    i = pl.program_id(0)
    g0 = i * TILE - R                       # global (output-rate) index of window row 0

    def mask(v, off_):
        g = g0 + off_ + lax.broadcasted_iota(jnp.int32, (v.shape[0], 1), 0)
        ok = (g >= 0) & (g < T_out)
        return jnp.where(ok, v, jnp.zeros_like(v))

    a = jnp.concatenate([x_ref[...], h_ref[...]], axis=0)        # (TILE+2R, C) bf16
    off = 0
    for (w1, b1, w2, b2, d) in ((w11, b11, w12, b12, 1), (w31, b31, w32, b32, 3)):
        xt = _valid_conv(_lrelu(a), w1[...], b1[...], 3, d)      # trims d / side
        off_t = off + d
        xt = mask(xt, off_t).astype(CDT)                         # per-layer zero-pad semantics
        y = _valid_conv(_lrelu(xt), w2[...], b2[...], 3, d)      # trims d / side
        off = off_t + d
        res = a[2 * d: 2 * d + y.shape[0], :].astype(jnp.float32)
        a = mask(y + res, off).astype(CDT)                       # fused residual add

    if include_post:                                             # conv_post + tanh fused
        y = _valid_conv(_lrelu(a), wp[...], bp[...], 7, 1)
        off += 3
        y = jnp.tanh(y)
        start = R - off
        o_ref[...] = y[start:start + TILE, :].astype(o_ref.dtype)
    else:
        start = R - off
        o_ref[...] = a[start:start + TILE, :].astype(o_ref.dtype)


def _rb_call(x, wts, post=None):
    t, c = x.shape
    R = 16 if post is not None else 8
    HB = 2 * R
    tile = _pick_tile(t, HB)
    n = _cdiv(t, tile)
    cout = 1 if post is not None else c
    odt = jnp.float32 if post is not None else CDT
    p_in = jnp.zeros((n * tile + HB, c), CDT).at[R:R + t].set(x.astype(CDT))
    args = [p_in, p_in] + list(wts) + (list(post) if post is not None else [])
    in_specs = [pl.BlockSpec((tile, c), lambda i: (i, 0)),
                pl.BlockSpec((HB, c), lambda i: ((i + 1) * (tile // HB), 0))]
    in_specs += [pl.BlockSpec(a.shape, lambda i: (0, 0)) for a in args[2:]]
    out = pl.pallas_call(
        functools.partial(_rb_kernel, TILE=tile, R=R, T_out=t,
                          include_post=post is not None),
        out_shape=jax.ShapeDtypeStruct((n * tile, cout), odt),
        grid=(n,),
        in_specs=in_specs,
        out_specs=pl.BlockSpec((tile, cout), lambda i: (i, 0)),
        compiler_params=pltpu.CompilerParams(dimension_semantics=("parallel",)),
    )(*args)
    return out[:t]


# ----------------------------- polyphase ConvTranspose1d -----------------------------
def make_polyphase_weight(w, r):
    """ConvTranspose1d(kernel=2r, stride=r, padding=r//2) == a 3-tap conv producing
    [T, r*Cout] followed by an interleave.  Tap 0/1/2 read input offsets -1/0/+1."""
    k, cin, cout = w.shape
    assert k == 2 * r and r % 2 == 0
    p_ = r // 2
    wp = jnp.zeros((3, cin, r * cout), w.dtype)
    for s in range(r):
        wp = wp.at[1, :, s * cout:(s + 1) * cout].set(w[s + p_])        # offset 0
        if s + p_ < r:
            wp = wp.at[0, :, s * cout:(s + 1) * cout].set(w[r + s + p_])  # offset -1
        else:
            wp = wp.at[2, :, s * cout:(s + 1) * cout].set(w[s + p_ - r])  # offset +1
    return wp


def _verify_polyphase(w, wp, r):
    """numpy check (tiny sizes, init-time) that the polyphase mapping == ConvTranspose1d."""
    k, cin, cout = w.shape
    t = 5
    rng = np.random.RandomState(0)
    x = rng.randn(t, cin).astype(np.float32)
    w_np, wp_np = np.asarray(w), np.asarray(wp)
    p_ = r // 2
    ref = np.zeros((t * r, cout), np.float32)
    for tt in range(t):
        for kk in range(k):
            o = tt * r + kk - p_
            if 0 <= o < t * r:
                ref[o] += x[tt] @ w_np[kk]
    xp = np.concatenate([np.zeros((1, cin), np.float32), x,
                         np.zeros((1, cin), np.float32)], axis=0)
    y = np.zeros((t, r * cout), np.float32)
    for j in range(3):
        y += xp[j:j + t] @ wp_np[j]
    assert np.allclose(ref, y.reshape(t * r, cout), atol=1e-4), "polyphase mismatch"


# ----------------------------- deterministic synthetic parameters --------------------
def make_params(key):
    keys = iter(jax.random.split(key, 64))
    p = {}

    def nw(shape, scale=0.1):
        return scale * jax.random.normal(next(keys), shape, dtype=jnp.float32)

    def zb(n):
        return jnp.zeros((n,), jnp.float32)

    p["phone_table"] = nw((VOCAB, F), 1.0)
    p["enc_in_w"], p["enc_in_b"] = nw((F, H)), zb(H)
    p["enc_c1_w"], p["enc_c1_b"] = nw((3, H, H)), zb(H)
    p["enc_c2_w"], p["enc_c2_b"] = nw((3, H, H)), zb(H)
    p["utt_w"], p["utt_b"] = nw((E, H)), zb(H)
    for name in ("dur", "pit", "ene"):
        p[f"{name}_c_w"], p[f"{name}_c_b"] = nw((3, H, H)), zb(H)
        p[f"{name}_o_w"], p[f"{name}_o_b"] = nw((H, 1)), zb(1)
    p["pit_e_w"], p["pit_e_b"] = nw((1, H)), zb(H)
    p["ene_e_w"], p["ene_e_b"] = nw((1, H)), zb(H)
    p["dec_c1_w"], p["dec_c1_b"] = nw((3, H, H)), zb(H)
    p["dec_c2_w"], p["dec_c2_b"] = nw((3, H, H)), zb(H)
    p["mel_w"], p["mel_b"] = nw((H, MEL)), zb(MEL)
    p["pre_w"], p["pre_b"] = nw((7, MEL, C)), zb(C)
    for s, r in enumerate(UPS):
        p[f"up{s}_w"], p[f"up{s}_b"] = nw((2 * r, C, C)), zb(C)
        for d in (1, 3):
            p[f"rb{s}_d{d}_w"], p[f"rb{s}_d{d}_b"] = nw((3, C, C)), zb(C)
            p[f"rb{s}_d{d}b_w"], p[f"rb{s}_d{d}b_b"] = nw((3, C, C)), zb(C)
    p["post_w"], p["post_b"] = nw((7, C, 1)), zb(1)

    # ---- kernel-ready parameters: fused, reshaped to (k*Cin, Cout), bf16 ----
    def w2d(w):
        return w.reshape(-1, w.shape[-1]).astype(CDT)

    def brow(b):
        return b.reshape(1, -1).astype(jnp.float32)

    p["k_enc_in_w"], p["k_enc_in_b"] = p["enc_in_w"].astype(CDT), brow(p["enc_in_b"])
    p["k_enc_c1_w"], p["k_enc_c1_b"] = w2d(p["enc_c1_w"]), brow(p["enc_c1_b"])
    p["k_enc_c2_w"], p["k_enc_c2_b"] = w2d(p["enc_c2_w"]), brow(p["enc_c2_b"])
    vp_w = jnp.concatenate([p["dur_c_w"], p["pit_c_w"], p["ene_c_w"]], axis=2)
    vp_b = jnp.concatenate([p["dur_c_b"], p["pit_c_b"], p["ene_c_b"]])
    p["k_vp_c_w"], p["k_vp_c_b"] = w2d(vp_w), brow(vp_b)
    vo = jnp.zeros((3 * H, 3), jnp.float32)
    vo = vo.at[0:H, 0].set(p["dur_o_w"][:, 0])
    vo = vo.at[H:2 * H, 1].set(p["pit_o_w"][:, 0])
    vo = vo.at[2 * H:, 2].set(p["ene_o_w"][:, 0])
    p["k_vp_o_w"] = vo.astype(CDT)
    p["k_vp_o_b"] = brow(jnp.concatenate([p["dur_o_b"], p["pit_o_b"], p["ene_o_b"]]))
    p["k_pe_w"] = jnp.concatenate([p["pit_e_w"], p["ene_e_w"]], axis=0).astype(jnp.float32)
    p["k_pe_b"] = (p["pit_e_b"] + p["ene_e_b"]).reshape(1, H).astype(jnp.float32)
    p["k_dec_c1_w"], p["k_dec_c1_b"] = w2d(p["dec_c1_w"]), brow(p["dec_c1_b"])
    p["k_dec_c2_w"], p["k_dec_c2_b"] = w2d(p["dec_c2_w"]), brow(p["dec_c2_b"])
    p["k_mel_w"], p["k_mel_b"] = p["mel_w"].astype(CDT), brow(p["mel_b"])
    p["k_pre_w"], p["k_pre_b"] = w2d(p["pre_w"]), brow(p["pre_b"])
    for s, r in enumerate(UPS):
        wp = make_polyphase_weight(p[f"up{s}_w"], r)
        _verify_polyphase(p[f"up{s}_w"], wp, r)
        p[f"k_up{s}_w"] = w2d(wp)
        p[f"k_up{s}_b"] = brow(jnp.tile(p[f"up{s}_b"], r))
        for d in (1, 3):
            p[f"k_rb{s}_d{d}_w"] = w2d(p[f"rb{s}_d{d}_w"])
            p[f"k_rb{s}_d{d}_b"] = brow(p[f"rb{s}_d{d}_b"])
            p[f"k_rb{s}_d{d}b_w"] = w2d(p[f"rb{s}_d{d}b_w"])
            p[f"k_rb{s}_d{d}b_b"] = brow(p[f"rb{s}_d{d}b_b"])
    p["k_post_w"], p["k_post_b"] = w2d(p["post_w"]), brow(p["post_b"])
    return p


# ----------------------------- text frontend (analog) --------------------------------
def text_to_phone_ids(text):
    # TODO(synk): real ArticulatoryCombinedTextFrontend (espeak G2P) has no Pallas
    # equivalent; a deterministic char->id mapping stands in for it.
    ids = [ord(c) % (VOCAB - 1) for c in text.lower() if not c.isspace()]
    ids.append(VOCAB - 1)  # add_silence_to_end=True
    return np.asarray(ids, dtype=np.int32)


# ----------------------------- FastSpeech2-lite forward ------------------------------
@jax.jit
def _fs2_encode(p, phones, utt_emb):
    tp = phones.shape[0]
    # tiny (1,E)@(E,H) speaker projection in plain JAX; broadcast add fused in-kernel.
    u = jnp.tanh(jnp.dot(utt_emb, p["utt_w"]) + p["utt_b"]).reshape(1, H).astype(jnp.float32)
    h_cond, vpo = pl.pallas_call(
        _encoder_kernel,
        out_shape=(jax.ShapeDtypeStruct((tp, H), CDT),
                   jax.ShapeDtypeStruct((tp, 3), jnp.float32)),
    )(phones.astype(CDT), u,
      p["k_enc_in_w"], p["k_enc_in_b"], p["k_enc_c1_w"], p["k_enc_c1_b"],
      p["k_enc_c2_w"], p["k_enc_c2_b"], p["k_vp_c_w"], p["k_vp_c_b"],
      p["k_vp_o_w"], p["k_vp_o_b"], p["k_pe_w"], p["k_pe_b"])
    durations = jnp.clip(jnp.round(jnp.exp(vpo[:, 0])), 1.0, 6.0).astype(jnp.int32)
    return h_cond, vpo, durations


@jax.jit
def _fs2_decode(p, h_cond, idx):
    h_reg = jnp.take(h_cond, idx, axis=0)
    tm = h_reg.shape[0]
    mel = pl.pallas_call(
        _decoder_kernel,
        out_shape=jax.ShapeDtypeStruct((tm, MEL), jnp.float32),
    )(h_reg, p["k_dec_c1_w"], p["k_dec_c1_b"], p["k_dec_c2_w"], p["k_dec_c2_b"],
      p["k_mel_w"], p["k_mel_b"])
    return mel


def fastspeech2_forward(p, phones, utt_emb):
    h_cond, vpo, durations = _fs2_encode(p, phones, utt_emb)
    # TODO(synk): the data-dependent LengthRegulator output length requires a host
    # round-trip for the (tiny) duration vector; an on-device variant would need a
    # bounded max mel length + masking.
    dur_np = np.asarray(jax.device_get(durations))
    idx = np.repeat(np.arange(phones.shape[0]), np.maximum(dur_np, 1))
    mel = _fs2_decode(p, h_cond, jnp.asarray(idx, dtype=jnp.int32))
    return mel, durations, vpo[:, 1], vpo[:, 2]


# ----------------------------- HiFiGAN-lite forward ----------------------------------
@jax.jit
def hifigan_forward(p, mel_ct):
    # mel_ct: [80, T_mel] (channel-first, matching `mel.transpose(0, 1)` in PyTorch)
    x = mel_ct.T.astype(CDT)                               # -> [T_mel, 80]
    for s, r in enumerate(UPS):
        pre = (p["k_pre_w"], p["k_pre_b"]) if s == 0 else None          # conv_pre fused
        x = _up_call(x, p[f"k_up{s}_w"], p[f"k_up{s}_b"], r, pre=pre)
        post = (p["k_post_w"], p["k_post_b"]) if s == len(UPS) - 1 else None
        wts = [p[f"k_rb{s}_d1_w"], p[f"k_rb{s}_d1_b"],
               p[f"k_rb{s}_d1b_w"], p[f"k_rb{s}_d1b_b"],
               p[f"k_rb{s}_d3_w"], p[f"k_rb{s}_d3_b"],
               p[f"k_rb{s}_d3b_w"], p[f"k_rb{s}_d3b_b"]]
        x = _rb_call(x, wts, post=post)                    # conv_post + tanh fused last
    return x[:, 0]                                         # 1-D waveform, float32


# ----------------------------- AnonFastSpeech2 analog --------------------------------
class AnonFastSpeech2:
    def __init__(self, key):
        # TODO(synk): checkpoint loading (torch.load) replaced with deterministic synthetic init.
        self.params = make_params(key)
        self.default_utterance_embedding = 0.1 * jax.random.normal(
            jax.random.PRNGKey(1), (E,), dtype=jnp.float32)

    def __call__(self, text, view=False, text_is_phonemes=False):
        ids = text_to_phone_ids(text)
        phones = jnp.take(self.params["phone_table"],
                          jnp.asarray(ids, dtype=jnp.int32), axis=0)       # [T, F]
        mel, durations, pitch, energy = fastspeech2_forward(
            self.params, phones, self.default_utterance_embedding)
        mel_ct = mel.T                                     # mel.transpose(0, 1) -> [80, T_mel]
        wave = hifigan_forward(self.params, mel_ct)
        # TODO(synk): `view` plotting path (matplotlib/librosa) intentionally omitted.
        return wave


# ----------------------------- demo ---------------------------------------------------
if __name__ == "__main__":
    model = AnonFastSpeech2(jax.random.PRNGKey(0))
    wave = model("Hello anonymization, this is a Pallas TPU kernel test.")
    wave = jax.block_until_ready(wave)
    assert wave.ndim == 1 and wave.dtype == jnp.float32
    assert np.isfinite(np.asarray(wave)).all()
    print("KERNEL_OK")
</pallas_src>

<mosaic_0001>
module attributes {stable_mosaic.version = 11 : i64} {
  func.func @_encoder_kernel(%arg0: memref<47x64xbf16, #tpu.memory_space<vmem>>, %arg1: memref<1x32xf32, #tpu.memory_space<vmem>>, %arg2: memref<64x32xbf16, #tpu.memory_space<vmem>>, %arg3: memref<1x32xf32, #tpu.memory_space<vmem>>, %arg4: memref<96x32xbf16, #tpu.memory_space<vmem>>, %arg5: memref<1x32xf32, #tpu.memory_space<vmem>>, %arg6: memref<96x32xbf16, #tpu.memory_space<vmem>>, %arg7: memref<1x32xf32, #tpu.memory_space<vmem>>, %arg8: memref<96x96xbf16, #tpu.memory_space<vmem>>, %arg9: memref<1x96xf32, #tpu.memory_space<vmem>>, %arg10: memref<96x3xbf16, #tpu.memory_space<vmem>>, %arg11: memref<1x3xf32, #tpu.memory_space<vmem>>, %arg12: memref<2x32xf32, #tpu.memory_space<vmem>>, %arg13: memref<1x32xf32, #tpu.memory_space<vmem>>, %arg14: memref<47x32xbf16, #tpu.memory_space<vmem>>, %arg15: memref<47x3xf32, #tpu.memory_space<vmem>>) attributes {dimension_semantics = [], scalar_prefetch = 0 : i64, scratch_operands = 0 : i64, tpu.core_type = #tpu.core_type<tc>} {
    %c0 = arith.constant 0 : index
    %c0_0 = arith.constant 0 : index
    %0 = vector.load %arg0[%c0, %c0_0] : memref<47x64xbf16, #tpu.memory_space<vmem>>, vector<47x64xbf16>
    %c0_1 = arith.constant 0 : index
    %c0_2 = arith.constant 0 : index
    %1 = vector.load %arg2[%c0_1, %c0_2] : memref<64x32xbf16, #tpu.memory_space<vmem>>, vector<64x32xbf16>
    %cst = arith.constant dense<0.000000e+00> : vector<47x32xf32>
    %2 = tpu.matmul %0, %1, %cst {dimension_numbers = #tpu.dot_dimension_numbers<[1], [0], [0], [1], [0, 0, 1, 1], [], []>} : vector<47x64xbf16>, vector<64x32xbf16>, vector<47x32xf32> -> vector<47x32xf32>
    %c0_3 = arith.constant 0 : index
    %c0_4 = arith.constant 0 : index
    %3 = vector.load %arg3[%c0_3, %c0_4] : memref<1x32xf32, #tpu.memory_space<vmem>>, vector<1x32xf32>
    %4 = vector.broadcast %3 : vector<1x32xf32> to vector<47x32xf32>
    %5 = arith.addf %2, %4 : vector<47x32xf32>
    %cst_5 = arith.constant 0.000000e+00 : f32
    %6 = vector.broadcast %cst_5 : f32 to vector<47x32xf32>
    %7 = arith.maximumf %5, %6 : vector<47x32xf32>
    %8 = arith.truncf %7 : vector<47x32xf32> to vector<47x32xbf16>
    %c0_6 = arith.constant 0 : index
    %c0_7 = arith.constant 0 : index
    %9 = vector.load %arg4[%c0_6, %c0_7] : memref<96x32xbf16, #tpu.memory_space<vmem>>, vector<96x32xbf16>
    %c0_8 = arith.constant 0 : index
    %c0_9 = arith.constant 0 : index
    %10 = vector.load %arg5[%c0_8, %c0_9] : memref<1x32xf32, #tpu.memory_space<vmem>>, vector<1x32xf32>
    %cst_10 = arith.constant 0.000000e+00 : bf16
    %11 = vector.broadcast %cst_10 : bf16 to vector<1x32xbf16>
    %12 = tpu.concatenate %11, %8, %11 in 0 : vector<1x32xbf16>, vector<47x32xbf16>, vector<1x32xbf16> -> vector<49x32xbf16>
    %13 = vector.extract_strided_slice %12 {offsets = [0, 0], sizes = [47, 32], strides = [1, 1]} : vector<49x32xbf16> to vector<47x32xbf16>
    %14 = vector.extract_strided_slice %12 {offsets = [1, 0], sizes = [47, 32], strides = [1, 1]} : vector<49x32xbf16> to vector<47x32xbf16>
    %15 = vector.extract_strided_slice %12 {offsets = [2, 0], sizes = [47, 32], strides = [1, 1]} : vector<49x32xbf16> to vector<47x32xbf16>
    %16 = tpu.concatenate %13, %14, %15 in 1 : vector<47x32xbf16>, vector<47x32xbf16>, vector<47x32xbf16> -> vector<47x96xbf16>
    %cst_11 = arith.constant dense<0.000000e+00> : vector<47x32xf32>
    %17 = tpu.matmul %16, %9, %cst_11 {dimension_numbers = #tpu.dot_dimension_numbers<[1], [0], [0], [1], [0, 0, 1, 1], [], []>} : vector<47x96xbf16>, vector<96x32xbf16>, vector<47x32xf32> -> vector<47x32xf32>
    %18 = vector.broadcast %10 : vector<1x32xf32> to vector<47x32xf32>
    %19 = arith.addf %17, %18 : vector<47x32xf32>
    %cst_12 = arith.constant 0.000000e+00 : f32
    %20 = vector.broadcast %cst_12 : f32 to vector<47x32xf32>
    %21 = arith.maximumf %19, %20 : vector<47x32xf32>
    %22 = arith.truncf %21 : vector<47x32xf32> to vector<47x32xbf16>
    %c0_13 = arith.constant 0 : index
    %c0_14 = arith.constant 0 : index
    %23 = vector.load %arg6[%c0_13, %c0_14] : memref<96x32xbf16, #tpu.memory_space<vmem>>, vector<96x32xbf16>
    %c0_15 = arith.constant 0 : index
    %c0_16 = arith.constant 0 : index
    %24 = vector.load %arg7[%c0_15, %c0_16] : memref<1x32xf32, #tpu.memory_space<vmem>>, vector<1x32xf32>
    %cst_17 = arith.constant 0.000000e+00 : bf16
    %25 = vector.broadcast %cst_17 : bf16 to vector<1x32xbf16>
    %26 = tpu.concatenate %25, %22, %25 in 0 : vector<1x32xbf16>, vector<47x32xbf16>, vector<1x32xbf16> -> vector<49x32xbf16>
    %27 = vector.extract_strided_slice %26 {offsets = [0, 0], sizes = [47, 32], strides = [1, 1]} : vector<49x32xbf16> to vector<47x32xbf16>
    %28 = vector.extract_strided_slice %26 {offsets = [1, 0], sizes = [47, 32], strides = [1, 1]} : vector<49x32xbf16> to vector<47x32xbf16>
    %29 = vector.extract_strided_slice %26 {offsets = [2, 0], sizes = [47, 32], strides = [1, 1]} : vector<49x32xbf16> to vector<47x32xbf16>
    %30 = tpu.concatenate %27, %28, %29 in 1 : vector<47x32xbf16>, vector<47x32xbf16>, vector<47x32xbf16> -> vector<47x96xbf16>
    %cst_18 = arith.constant dense<0.000000e+00> : vector<47x32xf32>
    %31 = tpu.matmul %30, %23, %cst_18 {dimension_numbers = #tpu.dot_dimension_numbers<[1], [0], [0], [1], [0, 0, 1, 1], [], []>} : vector<47x96xbf16>, vector<96x32xbf16>, vector<47x32xf32> -> vector<47x32xf32>
    %32 = vector.broadcast %24 : vector<1x32xf32> to vector<47x32xf32>
    %33 = arith.addf %31, %32 : vector<47x32xf32>
    %cst_19 = arith.constant 0.000000e+00 : f32
    %34 = vector.broadcast %cst_19 : f32 to vector<47x32xf32>
    %35 = arith.maximumf %33, %34 : vector<47x32xf32>
    %c0_20 = arith.constant 0 : index
    %c0_21 = arith.constant 0 : index
    %36 = vector.load %arg1[%c0_20, %c0_21] : memref<1x32xf32, #tpu.memory_space<vmem>>, vector<1x32xf32>
    %37 = vector.broadcast %36 : vector<1x32xf32> to vector<47x32xf32>
    %38 = arith.addf %35, %37 : vector<47x32xf32>
    %39 = arith.truncf %38 : vector<47x32xf32> to vector<47x32xbf16>
    %c0_22 = arith.constant 0 : index
    %c0_23 = arith.constant 0 : index
    %40 = vector.load %arg8[%c0_22, %c0_23] : memref<96x96xbf16, #tpu.memory_space<vmem>>, vector<96x96xbf16>
    %c0_24 = arith.constant 0 : index
    %c0_25 = arith.constant 0 : index
    %41 = vector.load %arg9[%c0_24, %c0_25] : memref<1x96xf32, #tpu.memory_space<vmem>>, vector<1x96xf32>
    %cst_26 = arith.constant 0.000000e+00 : bf16
    %42 = vector.broadcast %cst_26 : bf16 to vector<1x32xbf16>
    %43 = tpu.concatenate %42, %39, %42 in 0 : vector<1x32xbf16>, vector<47x32xbf16>, vector<1x32xbf16> -> vector<49x32xbf16>
    %44 = vector.extract_strided_slice %43 {offsets = [0, 0], sizes = [47, 32], strides = [1, 1]} : vector<49x32xbf16> to vector<47x32xbf16>
    %45 = vector.extract_strided_slice %43 {offsets = [1, 0], sizes = [47, 32], strides = [1, 1]} : vector<49x32xbf16> to vector<47x32xbf16>
    %46 = vector.extract_strided_slice %43 {offsets = [2, 0], sizes = [47, 32], strides = [1, 1]} : vector<49x32xbf16> to vector<47x32xbf16>
    %47 = tpu.concatenate %44, %45, %46 in 1 : vector<47x32xbf16>, vector<47x32xbf16>, vector<47x32xbf16> -> vector<47x96xbf16>
    %cst_27 = arith.constant dense<0.000000e+00> : vector<47x96xf32>
    %48 = tpu.matmul %47, %40, %cst_27 {dimension_numbers = #tpu.dot_dimension_numbers<[1], [0], [0], [1], [0, 0, 1, 1], [], []>} : vector<47x96xbf16>, vector<96x96xbf16>, vector<47x96xf32> -> vector<47x96xf32>
    %49 = vector.broadcast %41 : vector<1x96xf32> to vector<47x96xf32>
    %50 = arith.addf %48, %49 : vector<47x96xf32>
    %cst_28 = arith.constant 0.000000e+00 : f32
    %51 = vector.broadcast %cst_28 : f32 to vector<47x96xf32>
    %52 = arith.maximumf %50, %51 : vector<47x96xf32>
    %53 = arith.truncf %52 : vector<47x96xf32> to vector<47x96xbf16>
    %c0_29 = arith.constant 0 : index
    %c0_30 = arith.constant 0 : index
    %54 = vector.load %arg10[%c0_29, %c0_30] : memref<96x3xbf16, #tpu.memory_space<vmem>>, vector<96x3xbf16>
    %cst_31 = arith.constant dense<0.000000e+00> : vector<47x3xf32>
    %55 = tpu.matmul %53, %54, %cst_31 {dimension_numbers = #tpu.dot_dimension_numbers<[1], [0], [0], [1], [0, 0, 1, 1], [], []>} : vector<47x96xbf16>, vector<96x3xbf16>, vector<47x3xf32> -> vector<47x3xf32>
    %c0_32 = arith.constant 0 : index
    %c0_33 = arith.constant 0 : index
    %56 = vector.load %arg11[%c0_32, %c0_33] : memref<1x3xf32, #tpu.memory_space<vmem>>, vector<1x3xf32>
    %57 = vector.broadcast %56 : vector<1x3xf32> to vector<47x3xf32>
    %58 = arith.addf %55, %57 : vector<47x3xf32>
    %c0_34 = arith.constant 0 : index
    %c0_35 = arith.constant 0 : index
    %59 = vector.load %arg12[%c0_34, %c0_35] : memref<2x32xf32, #tpu.memory_space<vmem>>, vector<2x32xf32>
    %60 = vector.extract_strided_slice %58 {offsets = [0, 1], sizes = [47, 1], strides = [1, 1]} : vector<47x3xf32> to vector<47x1xf32>
    %61 = vector.extract_strided_slice %59 {offsets = [0, 0], sizes = [1, 32], strides = [1, 1]} : vector<2x32xf32> to vector<1x32xf32>
    %62 = vector.broadcast %60 : vector<47x1xf32> to vector<47x32xf32>
    %63 = vector.broadcast %61 : vector<1x32xf32> to vector<47x32xf32>
    %64 = arith.mulf %62, %63 : vector<47x32xf32>
    %65 = arith.addf %38, %64 : vector<47x32xf32>
    %66 = vector.extract_strided_slice %58 {offsets = [0, 2], sizes = [47, 1], strides = [1, 1]} : vector<47x3xf32> to vector<47x1xf32>
    %67 = vector.extract_strided_slice %59 {offsets = [1, 0], sizes = [1, 32], strides = [1, 1]} : vector<2x32xf32> to vector<1x32xf32>
    %68 = vector.broadcast %66 : vector<47x1xf32> to vector<47x32xf32>
    %69 = vector.broadcast %67 : vector<1x32xf32> to vector<47x32xf32>
    %70 = arith.mulf %68, %69 : vector<47x32xf32>
    %71 = arith.addf %65, %70 : vector<47x32xf32>
    %c0_36 = arith.constant 0 : index
    %c0_37 = arith.constant 0 : index
    %72 = vector.load %arg13[%c0_36, %c0_37] : memref<1x32xf32, #tpu.memory_space<vmem>>, vector<1x32xf32>
    %73 = vector.broadcast %72 : vector<1x32xf32> to vector<47x32xf32>
    %74 = arith.addf %71, %73 : vector<47x32xf32>
    %75 = arith.truncf %74 : vector<47x32xf32> to vector<47x32xbf16>
    %c0_38 = arith.constant 0 : index
    %c0_39 = arith.constant 0 : index
    %76 = vector.load %arg14[%c0_38, %c0_39] : memref<47x32xbf16, #tpu.memory_space<vmem>>, vector<47x32xbf16>
    tpu.vector_store %arg14[%c0_38, %c0_39], %75 {strides = array<i32>} : memref<47x32xbf16, #tpu.memory_space<vmem>>, vector<47x32xbf16>,
    %c0_40 = arith.constant 0 : index
    %c0_41 = arith.constant 0 : index
    %77 = vector.load %arg15[%c0_40, %c0_41] : memref<47x3xf32, #tpu.memory_space<vmem>>, vector<47x3xf32>
    tpu.vector_store %arg15[%c0_40, %c0_41], %58 {strides = array<i32>} : memref<47x3xf32, #tpu.memory_space<vmem>>, vector<47x3xf32>,
    return
  }
}

</mosaic_0001>

<llo_original>
// kernel: _fs2_encode.1
$region0: #{_fs2_encode.1}
  #allocation0 [shape = 'u32[]', space=smem, size = 0x4, offset = 0x4, fixed_abs, tag = 'smem constant byte address 0x4 - core index']
  #allocation1 [shape = 'u32[72,128]{1,0:T(1,128)}', space=vmem, size = 0x9000, scoped, tag = 'internal scratch']
  %s0 = inlined_call_operand.vmem [shape: bf16[47,64], index: 0, kind: input, shape index: {}]
  %s1 = inlined_call_operand.vmem [shape: f32[1,32], index: 1, kind: input, shape index: {}]
  %s2 = inlined_call_operand.vmem [shape: bf16[64,32], index: 2, kind: input, shape index: {}]
  %s3 = inlined_call_operand.vmem [shape: f32[1,32], index: 3, kind: input, shape index: {}]
  %s4 = inlined_call_operand.vmem [shape: bf16[96,32], index: 4, kind: input, shape index: {}]
  %s5 = inlined_call_operand.vmem [shape: f32[1,32], index: 5, kind: input, shape index: {}]
  %s6 = inlined_call_operand.vmem [shape: bf16[96,32], index: 6, kind: input, shape index: {}]
  %s7 = inlined_call_operand.vmem [shape: f32[1,32], index: 7, kind: input, shape index: {}]
  %s8 = inlined_call_operand.vmem [shape: bf16[96,96], index: 8, kind: input, shape index: {}]
  %s9 = inlined_call_operand.vmem [shape: f32[1,96], index: 9, kind: input, shape index: {}]
  %s10 = inlined_call_operand.vmem [shape: bf16[96,3], index: 10, kind: input, shape index: {}]
  %s11 = inlined_call_operand.vmem [shape: f32[1,3], index: 11, kind: input, shape index: {}]
  %s12 = inlined_call_operand.vmem [shape: f32[2,32], index: 12, kind: input, shape index: {}]
  %s13 = inlined_call_operand.vmem [shape: f32[1,32], index: 13, kind: input, shape index: {}]
  %s14 = inlined_call_operand.vmem [shape: bf16[47,32], index: 14, kind: output, shape index: {0}]
  %s15 = inlined_call_operand.vmem [shape: f32[47,3], index: 15, kind: output, shape index: {1}]
  %16 = xla_tuple %s14, %s15
  %s17 = sld [smem:[#allocation0]]
  $region74: #{_fs2_encode.1} parent=0
    _
  %s19 = ssub.s32 1, %s17
  %s20 = scalar_select 0, %s19, %s17
  // Predicated region
  $region2: #{_fs2_encode.1} parent=0 // pred_check
    _
  $region3: #{_fs2_encode.1} parent=0 // pred_check_branch
    %22 = sbr.rel (0) target = $region5
  $region4: #{_fs2_encode.1} parent=0 // pred_region
    _
  $region5: #{_fs2_encode.1} parent=0 // pred_fallthru
    _
  // Predicated region
  $region6: #{_fs2_encode.1} parent=0 // pred_check
    _
  $region7: #{_fs2_encode.1} parent=0 // pred_check_branch
    %24 = sbr.rel (0) target = $region9
  $region8: #{_fs2_encode.1} parent=0 // pred_region
    _
  $region9: #{_fs2_encode.1} parent=0 // pred_fallthru
    _
  // Predicated region
  $region10: #{_fs2_encode.1} parent=0 // pred_check
    _
  $region11: #{_fs2_encode.1} parent=0 // pred_check_branch
    %26 = sbr.rel (0) target = $region13
  $region12: #{_fs2_encode.1} parent=0 // pred_region
    _
  $region13: #{_fs2_encode.1} parent=0 // pred_fallthru
    _
  // Predicated region
  $region14: #{_fs2_encode.1} parent=0 // pred_check
    _
  $region15: #{_fs2_encode.1} parent=0 // pred_check_branch
    %28 = sbr.rel (0) target = $region17
  $region16: #{_fs2_encode.1} parent=0 // pred_region
    _
  $region17: #{_fs2_encode.1} parent=0 // pred_fallthru
    _
  // Predicated region
  $region18: #{_fs2_encode.1} parent=0 // pred_check
    _
  $region19: #{_fs2_encode.1} parent=0 // pred_check_branch
    %30 = sbr.rel (0) target = $region21
  $region20: #{_fs2_encode.1} parent=0 // pred_region
    _
  $region21: #{_fs2_encode.1} parent=0 // pred_fallthru
    _
  // Predicated region
  $region22: #{_fs2_encode.1} parent=0 // pred_check
    _
  $region23: #{_fs2_encode.1} parent=0 // pred_check_branch
    %32 = sbr.rel (0) target = $region25
  $region24: #{_fs2_encode.1} parent=0 // pred_region
    _
  $region25: #{_fs2_encode.1} parent=0 // pred_fallthru
    _
  // Predicated region
  $region26: #{_fs2_encode.1} parent=0 // pred_check
    _
  $region27: #{_fs2_encode.1} parent=0 // pred_check_branch
    %34 = sbr.rel (0) target = $region29
  $region28: #{_fs2_encode.1} parent=0 // pred_region
    _
  $region29: #{_fs2_encode.1} parent=0 // pred_fallthru
    _
  // Predicated region
  $region30: #{_fs2_encode.1} parent=0 // pred_check
    _
  $region31: #{_fs2_encode.1} parent=0 // pred_check_branch
    %36 = sbr.rel (0) target = $region33
  $region32: #{_fs2_encode.1} parent=0 // pred_region
    _
  $region33: #{_fs2_encode.1} parent=0 // pred_fallthru
    _
  // Predicated region
  $region34: #{_fs2_encode.1} parent=0 // pred_check
    _
  $region35: #{_fs2_encode.1} parent=0 // pred_check_branch
    %38 = sbr.rel (0) target = $region37
  $region36: #{_fs2_encode.1} parent=0 // pred_region
    _
  $region37: #{_fs2_encode.1} parent=0 // pred_fallthru
    _
  // Predicated region
  $region38: #{_fs2_encode.1} parent=0 // pred_check
    _
  $region39: #{_fs2_encode.1} parent=0 // pred_check_branch
    %40 = sbr.rel (0) target = $region41
  $region40: #{_fs2_encode.1} parent=0 // pred_region
    _
  $region41: #{_fs2_encode.1} parent=0 // pred_fallthru
    _
  // Predicated region
  $region42: #{_fs2_encode.1} parent=0 // pred_check
    _
  $region43: #{_fs2_encode.1} parent=0 // pred_check_branch
    %42 = sbr.rel (0) target = $region45
  $region44: #{_fs2_encode.1} parent=0 // pred_region
    _
  $region45: #{_fs2_encode.1} parent=0 // pred_fallthru
    _
  // Predicated region
  $region46: #{_fs2_encode.1} parent=0 // pred_check
    _
  $region47: #{_fs2_encode.1} parent=0 // pred_check_branch
    %44 = sbr.rel (0) target = $region49
  $region48: #{_fs2_encode.1} parent=0 // pred_region
    _
  $region49: #{_fs2_encode.1} parent=0 // pred_fallthru
    _
  // Predicated region
  $region50: #{_fs2_encode.1} parent=0 // pred_check
    _
  $region51: #{_fs2_encode.1} parent=0 // pred_check_branch
    %46 = sbr.rel (0) target = $region53
  $region52: #{_fs2_encode.1} parent=0 // pred_region
    _
  $region53: #{_fs2_encode.1} parent=0 // pred_fallthru
    _
  // Predicated region
  $region54: #{_fs2_encode.1} parent=0 // pred_check
    _
  $region55: #{_fs2_encode.1} parent=0 // pred_check_branch
    %48 = sbr.rel (0) target = $region57
  $region56: #{_fs2_encode.1} parent=0 // pred_region
    _
  $region57: #{_fs2_encode.1} parent=0 // pred_fallthru
    _
  %v50 = vld [vmem:[%s0] sm:$0xf]
  %v51 = vld [vmem:[%s0 + $0x4] sm:$0xf]
  %v52 = vld [vmem:[%s0 + $0x8] sm:$0xf]
  %v53 = vld [vmem:[%s0 + $0xc] sm:$0xf]
  %v54 = vld [vmem:[%s0 + $0x10] sm:$0xf]
  %v55 = vld [vmem:[%s0 + $0x14] sm:$0xf]
  %v56 = vld [vmem:[%s2] sm:$0xf]
  %v57 = vld [vmem:[%s2 + $0x4] sm:$0xf]
  %v58 = vld [vmem:[%s2 + $0x8] sm:$0xf]
  %v59 = vld [vmem:[%s2 + $0xc] sm:$0xf]
  %v60 = vld [vmem:[%s2 + $0x10] sm:$0xf]
  %v61 = vld [vmem:[%s2 + $0x14] sm:$0xf]
  %v62 = vld [vmem:[%s2 + $0x18] sm:$0xf]
  %v63 = vld [vmem:[%s2 + $0x1c] sm:$0xf]
  %v64 = vld [vmem:[%s3] sm:$0x1]
  %v66 = vperm.slane %v64, 0
  %v74 = vunpack.c.l.b16 %v50
  %v75 = vunpack.c.l.b16 %v51
  %v76 = vunpack.c.l.b16 %v52
  %v77 = vunpack.c.l.b16 %v53
  %v78 = vunpack.c.l.b16 %v54
  %v79 = vunpack.c.l.b16 %v55
  %v80 = vpack.c.b16 %v75, %v74
  %v81 = vpack.c.b16 %v77, %v76
  %v82 = vpack.c.b16 %v79, %v78
  %v91 = vunpack.c.l.b16 %v56
  %v92 = vunpack.c.l.b16 %v57
  %v93 = vunpack.c.l.b16 %v58
  %v94 = vunpack.c.l.b16 %v59
  %v95 = vunpack.c.l.b16 %v60
  %v96 = vunpack.c.l.b16 %v61
  %v97 = vunpack.c.l.b16 %v62
  %v98 = vunpack.c.l.b16 %v63
  %v99 = vpack.c.b16 %v92, %v91
  %v100 = vpack.c.b16 %v94, %v93
  %v101 = vpack.c.b16 %v96, %v95
  %v102 = vpack.c.b16 %v98, %v97
  %vm107 = vcmask 523264
  %v109 = vsel %vm107, %v80, 0
  %v112 = vsel %vm107, %v81, 0
  %v115 = vsel %vm107, %v82, 0
  %117 = vmatpush.bf16.msra.mxu0 0
  %118 = vmatpush.bf16.msra.mxu0 0
  %119 = vmatpush.bf16.msra.mxu0 0
  %120 = vmatpush.bf16.msra.mxu0 0
  %121 = vmatpush.bf16.msra.mxu0 %v102
  %122 = vmatpush.bf16.msra.mxu0 %v101
  %123 = vmatpush.bf16.msra.mxu0 %v100
  %124 = vmatpush.bf16.msra.mxu0 %v99
  %125 = vmatmul.bf16.gmra.mxu0 %v109
  %v126 = vpop.f32.mrf.mxu0
  %v127 = vadd.f32 %v66, %v126
  %v128 = vpop.f32.mrf.mxu0
  %v129 = vadd.f32 %v66, %v128
  %130 = vmatmul.bf16.gmra.mxu0 %v112
  %v131 = vpop.f32.mrf.mxu0
  %v132 = vadd.f32 %v66, %v131
  %v133 = vpop.f32.mrf.mxu0
  %v134 = vadd.f32 %v66, %v133
  %135 = vmatmul.bf16.gmra.mxu0 %v115
  %v136 = vpop.f32.mrf.mxu0
  %v137 = vadd.f32 %v66, %v136
  %v138 = vpop.f32.mrf.mxu0
  %v139 = vadd.f32 %v66, %v138
  %140 = vdwg.mxu0
  %v141 = vmax.f32 %v127, 0.0
  %v142 = vmax.f32 %v129, 0.0
  %v143 = vmax.f32 %v132, 0.0
  %v144 = vmax.f32 %v134, 0.0
  %v145 = vmax.f32 %v137, 0.0
  %v146 = vmax.f32 %v139, 0.0
  %v147 = vpack.c.bf16 %v141, %v141
  %v148 = vpack.c.bf16 %v142, %v142
  %v149 = vpack.c.bf16 %v143, %v143
  %v150 = vpack.c.bf16 %v144, %v144
  %v151 = vpack.c.bf16 %v145, %v145
  %v152 = vpack.c.bf16 %v146, %v146
  %v153 = vld [vmem:[%s4] sm:$0xf]
  %v154 = vld [vmem:[%s4 + $0x4] sm:$0xf]
  %v155 = vld [vmem:[%s4 + $0x8] sm:$0xf]
  %v156 = vld [vmem:[%s4 + $0xc] sm:$0xf]
  %v157 = vld [vmem:[%s4 + $0x10] sm:$0xf]
  %v158 = vld [vmem:[%s4 + $0x14] sm:$0xf]
  %v159 = vld [vmem:[%s4 + $0x18] sm:$0xf]
  %v160 = vld [vmem:[%s4 + $0x1c] sm:$0xf]
  %v161 = vld [vmem:[%s4 + $0x20] sm:$0xf]
  %v162 = vld [vmem:[%s4 + $0x24] sm:$0xf]
  %v163 = vld [vmem:[%s4 + $0x28] sm:$0xf]
  %v164 = vld [vmem:[%s4 + $0x2c] sm:$0xf]
  %v165 = vld [vmem:[%s5] sm:$0x1]
  %v172 = vunpack.c.l.b16 %v147
  %v173 = vunpack.c.l.b16 %v148
  %v174 = vunpack.c.l.b16 %v149
  %v175 = vunpack.c.l.b16 %v150
  %v176 = vunpack.c.l.b16 %v151
  %v177 = vunpack.c.l.b16 %v152
  %v178 = vpack.c.b16 %v173, %v172
  %v179 = vpack.c.b16 %v175, %v174
  %v180 = vpack.c.b16 %v177, %v176
  %vm181 = vsmask.f32 256
  %v183 = vshrl.u32 %v178, 16
  %v185 = vrot.slane %v183, 7
  %v186 = vshll.u32 %v178, 16
  %v188 = vor.u32 %v185, %v186
  %v190 = vshrl.u32 %v179, 16
  %v192 = vrot.slane %v190, 7
  %v193 = vshll.u32 %v179, 16
  %v195 = vor.u32 %v192, %v193
  %v196 = vsel %vm181, %v185, %v195
  %v198 = vshrl.u32 %v180, 16
  %v200 = vrot.slane %v198, 7
  %v201 = vshll.u32 %v180, 16
  %v203 = vor.u32 %v200, %v201
  %v204 = vsel %vm181, %v192, %v203
  %vm206 = vcmask 1040384
  %vm207 = vmand %vm206, %vm181
  %v208 = vsel %vm207, 0, %v188
  %vm209 = vsmask.f32 7424
  %v211 = vshrl.u32 %v208, 16
  %v213 = vshll.u32 %v208, 16
  %v215 = vrot.slane %v213, 1
  %v216 = vor.u32 %v211, %v215
  %v218 = vshll.u32 %v196, 16
  %v220 = vrot.slane %v218, 1
  %v221 = vsel %vm209, %v216, %v220
  %v222 = vshrl.u32 %v196, 16
  %v224 = vor.u32 %v222, %v220
  %v226 = vshll.u32 %v204, 16
  %v228 = vrot.slane %v226, 1
  %v229 = vsel %vm209, %v224, %v228
  %v230 = vshrl.u32 %v204, 16
  %v232 = vor.u32 %v230, %v228
  %233 = vrot.lane.b32.xlu0 %v221, 32
  %v234 = vpop.permute.xlu0 %233
  %235 = vrot.lane.b32.xlu0 %v229, 32
  %v236 = vpop.permute.xlu0 %235
  %237 = vrot.lane.b32.xlu0 %v232, 32
  %v238 = vpop.permute.xlu0 %237
  %vm241 = vcmask 1046528
  %v242 = vrot.slane %v208, 1
  %v243 = vrot.slane %v196, 1
  %v244 = vsel %vm241, %v242, %v243
  %v245 = vrot.slane %v204, 1
  %v246 = vsel %vm241, %v243, %v245
  %v247 = vrot.slane 0, 1
  %v248 = vsel %vm241, %v245, %v247
  %249 = vrot.lane.b32.xlu0 %v244, 64
  %v250 = vpop.permute.xlu0 %249
  %251 = vrot.lane.b32.xlu0 %v246, 64
  %v252 = vpop.permute.xlu0 %251
  %253 = vrot.lane.b32.xlu0 %v248, 64
  %v254 = vpop.permute.xlu0 %253
  %vm255 = vcmask 261120
  %v257 = vsel %vm255, %v208, %v234
  %v259 = vsel %vm255, %v196, %v236
  %v261 = vsel %vm255, %v204, %v238
  %v263 = vsel %vm107, %v257, %v250
  %v265 = vsel %vm107, %v259, %v252
  %v267 = vsel %vm107, %v261, %v254
  %v269 = vperm.slane %v165, 0
  %v283 = vunpack.c.l.b16 %v153
  %v284 = vunpack.c.l.b16 %v154
  %v285 = vunpack.c.l.b16 %v155
  %v286 = vunpack.c.l.b16 %v156
  %v287 = vunpack.c.l.b16 %v157
  %v288 = vunpack.c.l.b16 %v158
  %v289 = vunpack.c.l.b16 %v159
  %v290 = vunpack.c.l.b16 %v160
  %v291 = vunpack.c.l.b16 %v161
  %v292 = vunpack.c.l.b16 %v162
  %v293 = vunpack.c.l.b16 %v163
  %v294 = vunpack.c.l.b16 %v164
  %v295 = vpack.c.b16 %v284, %v283
  %v296 = vpack.c.b16 %v286, %v285
  %v297 = vpack.c.b16 %v288, %v287
  %v298 = vpack.c.b16 %v290, %v289
  %v299 = vpack.c.b16 %v292, %v291
  %v300 = vpack.c.b16 %v294, %v293
  %vm307 = vcmask 785408
  %v308 = vsel %vm307, %v263, 0
  %v310 = vsel %vm307, %v265, 0
  %v312 = vsel %vm307, %v267, 0
  %314 = vmatpush.bf16.msra.mxu0 0
  %315 = vmatpush.bf16.msra.mxu0 0
  %316 = vmatpush.bf16.msra.mxu0 %v300
  %317 = vmatpush.bf16.msra.mxu0 %v299
  %318 = vmatpush.bf16.msra.mxu0 %v298
  %319 = vmatpush.bf16.msra.mxu0 %v297
  %320 = vmatpush.bf16.msra.mxu0 %v296
  %321 = vmatpush.bf16.msra.mxu0 %v295
  %322 = vmatmul.bf16.gmra.mxu0 %v308
  %v323 = vpop.f32.mrf.mxu0
  %v324 = vadd.f32 %v269, %v323
  %v325 = vpop.f32.mrf.mxu0
  %v326 = vadd.f32 %v269, %v325
  %327 = vmatmul.bf16.gmra.mxu0 %v310
  %v328 = vpop.f32.mrf.mxu0
  %v329 = vadd.f32 %v269, %v328
  %v330 = vpop.f32.mrf.mxu0
  %v331 = vadd.f32 %v269, %v330
  %332 = vmatmul.bf16.gmra.mxu0 %v312
  %v333 = vpop.f32.mrf.mxu0
  %v334 = vadd.f32 %v269, %v333
  %v335 = vpop.f32.mrf.mxu0
  %v336 = vadd.f32 %v269, %v335
  %337 = vdwg.mxu0
  %v338 = vmax.f32 %v324, 0.0
  %v339 = vmax.f32 %v326, 0.0
  %v340 = vmax.f32 %v329, 0.0
  %v341 = vmax.f32 %v331, 0.0
  %v342 = vmax.f32 %v334, 0.0
  %v343 = vmax.f32 %v336, 0.0
  %v344 = vpack.c.bf16 %v338, %v338
  %v345 = vpack.c.bf16 %v339, %v339
  %v346 = vpack.c.bf16 %v340, %v340
  %v347 = vpack.c.bf16 %v341, %v341
  %v348 = vpack.c.bf16 %v342, %v342
  %v349 = vpack.c.bf16 %v343, %v343
  %v350 = vld [vmem:[%s6] sm:$0xf]
  %v351 = vld [vmem:[%s6 + $0x4] sm:$0xf]
  %v352 = vld [vmem:[%s6 + $0x8] sm:$0xf]
  %v353 = vld [vmem:[%s6 + $0xc] sm:$0xf]
  %v354 = vld [vmem:[%s6 + $0x10] sm:$0xf]
  %v355 = vld [vmem:[%s6 + $0x14] sm:$0xf]
  %v356 = vld [vmem:[%s6 + $0x18] sm:$0xf]
  %v357 = vld [vmem:[%s6 + $0x1c] sm:$0xf]
  %v358 = vld [vmem:[%s6 + $0x20] sm:$0xf]
  %v359 = vld [vmem:[%s6 + $0x24] sm:$0xf]
  %v360 = vld [vmem:[%s6 + $0x28] sm:$0xf]
  %v361 = vld [vmem:[%s6 + $0x2c] sm:$0xf]
  %v362 = vld [vmem:[%s7] sm:$0x1]
  %v369 = vunpack.c.l.b16 %v344
  %v370 = vunpack.c.l.b16 %v345
  %v371 = vunpack.c.l.b16 %v346
  %v372 = vunpack.c.l.b16 %v347
  %v373 = vunpack.c.l.b16 %v348
  %v374 = vunpack.c.l.b16 %v349
  %v375 = vpack.c.b16 %v370, %v369
  %v376 = vpack.c.b16 %v372, %v371
  %v377 = vpack.c.b16 %v374, %v373
  %v379 = vshrl.u32 %v375, 16
  %v381 = vrot.slane %v379, 7
  %v382 = vshll.u32 %v375, 16
  %v384 = vor.u32 %v381, %v382
  %v386 = vshrl.u32 %v376, 16
  %v388 = vrot.slane %v386, 7
  %v389 = vshll.u32 %v376, 16
  %v391 = vor.u32 %v388, %v389
  %v392 = vsel %vm181, %v381, %v391
  %v394 = vshrl.u32 %v377, 16
  %v396 = vrot.slane %v394, 7
  %v397 = vshll.u32 %v377, 16
  %v399 = vor.u32 %v396, %v397
  %v400 = vsel %vm181, %v388, %v399
  %v402 = vsel %vm207, 0, %v384
  %v404 = vshrl.u32 %v402, 16
  %v406 = vshll.u32 %v402, 16
  %v408 = vrot.slane %v406, 1
  %v409 = vor.u32 %v404, %v408
  %v411 = vshll.u32 %v392, 16
  %v413 = vrot.slane %v411, 1
  %v414 = vsel %vm209, %v409, %v413
  %v415 = vshrl.u32 %v392, 16
  %v417 = vor.u32 %v415, %v413
  %v419 = vshll.u32 %v400, 16
  %v421 = vrot.slane %v419, 1
  %v422 = vsel %vm209, %v417, %v421
  %v423 = vshrl.u32 %v400, 16
  %v425 = vor.u32 %v423, %v421
  %426 = vrot.lane.b32.xlu0 %v414, 32
  %v427 = vpop.permute.xlu0 %426
  %428 = vrot.lane.b32.xlu0 %v422, 32
  %v429 = vpop.permute.xlu0 %428
  %430 = vrot.lane.b32.xlu0 %v425, 32
  %v431 = vpop.permute.xlu0 %430
  %v433 = vrot.slane %v402, 1
  %v434 = vrot.slane %v392, 1
  %v435 = vsel %vm241, %v433, %v434
  %v436 = vrot.slane %v400, 1
  %v437 = vsel %vm241, %v434, %v436
  %v438 = vsel %vm241, %v436, %v247
  %439 = vrot.lane.b32.xlu0 %v435, 64
  %v440 = vpop.permute.xlu0 %439
  %441 = vrot.lane.b32.xlu0 %v437, 64
  %v442 = vpop.permute.xlu0 %441
  %443 = vrot.lane.b32.xlu0 %v438, 64
  %v444 = vpop.permute.xlu0 %443
  %v446 = vsel %vm255, %v402, %v427
  %v448 = vsel %vm255, %v392, %v429
  %v450 = vsel %vm255, %v400, %v431
  %v452 = vsel %vm107, %v446, %v440
  %v454 = vsel %vm107, %v448, %v442
  %v456 = vsel %vm107, %v450, %v444
  %v458 = vperm.slane %v362, 0
  %v472 = vunpack.c.l.b16 %v350
  %v473 = vunpack.c.l.b16 %v351
  %v474 = vunpack.c.l.b16 %v352
  %v475 = vunpack.c.l.b16 %v353
  %v476 = vunpack.c.l.b16 %v354
  %v477 = vunpack.c.l.b16 %v355
  %v478 = vunpack.c.l.b16 %v356
  %v479 = vunpack.c.l.b16 %v357
  %v480 = vunpack.c.l.b16 %v358
  %v481 = vunpack.c.l.b16 %v359
  %v482 = vunpack.c.l.b16 %v360
  %v483 = vunpack.c.l.b16 %v361
  %v484 = vpack.c.b16 %v473, %v472
  %v485 = vpack.c.b16 %v475, %v474
  %v486 = vpack.c.b16 %v477, %v476
  %v487 = vpack.c.b16 %v479, %v478
  %v488 = vpack.c.b16 %v481, %v480
  %v489 = vpack.c.b16 %v483, %v482
  %v496 = vsel %vm307, %v452, 0
  %v498 = vsel %vm307, %v454, 0
  %v500 = vsel %vm307, %v456, 0
  %502 = vmatpush.bf16.msra.mxu0 0
  %503 = vmatpush.bf16.msra.mxu0 0
  %504 = vmatpush.bf16.msra.mxu0 %v489
  %505 = vmatpush.bf16.msra.mxu0 %v488
  %506 = vmatpush.bf16.msra.mxu0 %v487
  %507 = vmatpush.bf16.msra.mxu0 %v486
  %508 = vmatpush.bf16.msra.mxu0 %v485
  %509 = vmatpush.bf16.msra.mxu0 %v484
  %510 = vmatmul.bf16.gmra.mxu0 %v496
  %v511 = vpop.f32.mrf.mxu0
  %v512 = vadd.f32 %v458, %v511
  %v513 = vpop.f32.mrf.mxu0
  %v514 = vadd.f32 %v458, %v513
  %515 = vmatmul.bf16.gmra.mxu0 %v498
  %v516 = vpop.f32.mrf.mxu0
  %v517 = vadd.f32 %v458, %v516
  %v518 = vpop.f32.mrf.mxu0
  %v519 = vadd.f32 %v458, %v518
  %520 = vmatmul.bf16.gmra.mxu0 %v500
  %v521 = vpop.f32.mrf.mxu0
  %v522 = vadd.f32 %v458, %v521
  %v523 = vpop.f32.mrf.mxu0
  %v524 = vadd.f32 %v458, %v523
  %525 = vdwg.mxu0
  %v526 = vmax.f32 %v512, 0.0
  %v527 = vmax.f32 %v514, 0.0
  %v528 = vmax.f32 %v517, 0.0
  %v529 = vmax.f32 %v519, 0.0
  %v530 = vmax.f32 %v522, 0.0
  %v531 = vmax.f32 %v524, 0.0
  %v532 = vld [vmem:[%s1] sm:$0x1]
  %v534 = vperm.slane %v532, 0
  %v536 = vadd.f32 %v526, %v534
  %v537 = vadd.f32 %v527, %v534
  %v538 = vadd.f32 %v528, %v534
  %v539 = vadd.f32 %v529, %v534
  %v540 = vadd.f32 %v530, %v534
  %v541 = vadd.f32 %v531, %v534
  %v542 = vpack.c.bf16 %v536, %v536
  %v543 = vpack.c.bf16 %v537, %v537
  %v544 = vpack.c.bf16 %v538, %v538
  %v545 = vpack.c.bf16 %v539, %v539
  %v546 = vpack.c.bf16 %v540, %v540
  %v547 = vpack.c.bf16 %v541, %v541
  %v548 = vld [vmem:[%s8] sm:$0xf]
  %v549 = vld [vmem:[%s8 + $0x4] sm:$0xf]
  %v550 = vld [vmem:[%s8 + $0x8] sm:$0xf]
  %v551 = vld [vmem:[%s8 + $0xc] sm:$0xf]
  %v552 = vld [vmem:[%s8 + $0x10] sm:$0xf]
  %v553 = vld [vmem:[%s8 + $0x14] sm:$0xf]
  %v554 = vld [vmem:[%s8 + $0x18] sm:$0xf]
  %v555 = vld [vmem:[%s8 + $0x1c] sm:$0xf]
  %v556 = vld [vmem:[%s8 + $0x20] sm:$0xf]
  %v557 = vld [vmem:[%s8 + $0x24] sm:$0xf]
  %v558 = vld [vmem:[%s8 + $0x28] sm:$0xf]
  %v559 = vld [vmem:[%s8 + $0x2c] sm:$0xf]
  %v560 = vld [vmem:[%s9] sm:$0x1]
  %v567 = vunpack.c.l.b16 %v542
  %v568 = vunpack.c.l.b16 %v543
  %v569 = vunpack.c.l.b16 %v544
  %v570 = vunpack.c.l.b16 %v545
  %v571 = vunpack.c.l.b16 %v546
  %v572 = vunpack.c.l.b16 %v547
  %v573 = vpack.c.b16 %v568, %v567
  %v574 = vpack.c.b16 %v570, %v569
  %v575 = vpack.c.b16 %v572, %v571
  %v577 = vshrl.u32 %v573, 16
  %v579 = vrot.slane %v577, 7
  %v580 = vshll.u32 %v573, 16
  %v582 = vor.u32 %v579, %v580
  %v584 = vshrl.u32 %v574, 16
  %v586 = vrot.slane %v584, 7
  %v587 = vshll.u32 %v574, 16
  %v589 = vor.u32 %v586, %v587
  %v590 = vsel %vm181, %v579, %v589
  %v592 = vshrl.u32 %v575, 16
  %v594 = vrot.slane %v592, 7
  %v595 = vshll.u32 %v575, 16
  %v597 = vor.u32 %v594, %v595
  %v598 = vsel %vm181, %v586, %v597
  %v600 = vsel %vm207, 0, %v582
  %v602 = vshrl.u32 %v600, 16
  %v604 = vshll.u32 %v600, 16
  %v606 = vrot.slane %v604, 1
  %v607 = vor.u32 %v602, %v606
  %v609 = vshll.u32 %v590, 16
  %v611 = vrot.slane %v609, 1
  %v612 = vsel %vm209, %v607, %v611
  %v613 = vshrl.u32 %v590, 16
  %v615 = vor.u32 %v613, %v611
  %v617 = vshll.u32 %v598, 16
  %v619 = vrot.slane %v617, 1
  %v620 = vsel %vm209, %v615, %v619
  %v621 = vshrl.u32 %v598, 16
  %v623 = vor.u32 %v621, %v619
  %624 = vrot.lane.b32.xlu0 %v612, 32
  %v625 = vpop.permute.xlu0 %624
  %626 = vrot.lane.b32.xlu0 %v620, 32
  %v627 = vpop.permute.xlu0 %626
  %628 = vrot.lane.b32.xlu0 %v623, 32
  %v629 = vpop.permute.xlu0 %628
  %v631 = vrot.slane %v600, 1
  %v632 = vrot.slane %v590, 1
  %v633 = vsel %vm241, %v631, %v632
  %v634 = vrot.slane %v598, 1
  %v635 = vsel %vm241, %v632, %v634
  %v636 = vsel %vm241, %v634, %v247
  %637 = vrot.lane.b32.xlu0 %v633, 64
  %v638 = vpop.permute.xlu0 %637
  %639 = vrot.lane.b32.xlu0 %v635, 64
  %v640 = vpop.permute.xlu0 %639
  %641 = vrot.lane.b32.xlu0 %v636, 64
  %v642 = vpop.permute.xlu0 %641
  %v644 = vsel %vm255, %v600, %v625
  %v646 = vsel %vm255, %v590, %v627
  %v648 = vsel %vm255, %v598, %v629
  %v650 = vsel %vm107, %v644, %v638
  %v652 = vsel %vm107, %v646, %v640
  %v654 = vsel %vm107, %v648, %v642
  %v656 = vperm.slane %v560, 0
  %v670 = vunpack.c.l.b16 %v548
  %v671 = vunpack.c.l.b16 %v549
  %v672 = vunpack.c.l.b16 %v550
  %v673 = vunpack.c.l.b16 %v551
  %v674 = vunpack.c.l.b16 %v552
  %v675 = vunpack.c.l.b16 %v553
  %v676 = vunpack.c.l.b16 %v554
  %v677 = vunpack.c.l.b16 %v555
  %v678 = vunpack.c.l.b16 %v556
  %v679 = vunpack.c.l.b16 %v557
  %v680 = vunpack.c.l.b16 %v558
  %v681 = vunpack.c.l.b16 %v559
  %v682 = vpack.c.b16 %v671, %v670
  %v683 = vpack.c.b16 %v673, %v672
  %v684 = vpack.c.b16 %v675, %v674
  %v685 = vpack.c.b16 %v677, %v676
  %v686 = vpack.c.b16 %v679, %v678
  %v687 = vpack.c.b16 %v681, %v680
  %v694 = vsel %vm307, %v650, 0
  %v696 = vsel %vm307, %v652, 0
  %v698 = vsel %vm307, %v654, 0
  %700 = vmatpush.bf16.msra.mxu0 0
  %701 = vmatpush.bf16.msra.mxu0 0
  %702 = vmatpush.bf16.msra.mxu0 %v687
  %703 = vmatpush.bf16.msra.mxu0 %v686
  %704 = vmatpush.bf16.msra.mxu0 %v685
  %705 = vmatpush.bf16.msra.mxu0 %v684
  %706 = vmatpush.bf16.msra.mxu0 %v683
  %707 = vmatpush.bf16.msra.mxu0 %v682
  %708 = vmatmul.bf16.gmra.mxu0 %v694
  %v709 = vpop.f32.mrf.mxu0
  %v710 = vadd.f32 %v656, %v709
  %v711 = vpop.f32.mrf.mxu0
  %v712 = vadd.f32 %v656, %v711
  %713 = vmatmul.bf16.gmra.mxu0 %v696
  %v714 = vpop.f32.mrf.mxu0
  %v715 = vadd.f32 %v656, %v714
  %v716 = vpop.f32.mrf.mxu0
  %v717 = vadd.f32 %v656, %v716
  %718 = vmatmul.bf16.gmra.mxu0 %v698
  %v719 = vpop.f32.mrf.mxu0
  %v720 = vadd.f32 %v656, %v719
  %v721 = vpop.f32.mrf.mxu0
  %v722 = vadd.f32 %v656, %v721
  %723 = vdwg.mxu0
  %v724 = vmax.f32 %v710, 0.0
  %v725 = vmax.f32 %v712, 0.0
  %v726 = vmax.f32 %v715, 0.0
  %v727 = vmax.f32 %v717, 0.0
  %v728 = vmax.f32 %v720, 0.0
  %v729 = vmax.f32 %v722, 0.0
  %v730 = vpack.c.bf16 %v725, %v724
  %v731 = vpack.c.bf16 %v727, %v726
  %v732 = vpack.c.bf16 %v729, %v728
  %v733 = vld [vmem:[%s10] sm:$0xf]
  %v734 = vld [vmem:[%s10 + $0x4] sm:$0xf]
  %v735 = vld [vmem:[%s10 + $0x8] sm:$0xf]
  %v736 = vld [vmem:[%s10 + $0xc] sm:$0xf]
  %v737 = vld [vmem:[%s10 + $0x10] sm:$0xf]
  %v738 = vld [vmem:[%s10 + $0x14] sm:$0xf]
  %v739 = vld [vmem:[%s10 + $0x18] sm:$0xf]
  %v740 = vld [vmem:[%s10 + $0x1c] sm:$0xf]
  %v741 = vld [vmem:[%s10 + $0x20] sm:$0xf]
  %v742 = vld [vmem:[%s10 + $0x24] sm:$0xf]
  %v743 = vld [vmem:[%s10 + $0x28] sm:$0xf]
  %v744 = vld [vmem:[%s10 + $0x2c] sm:$0xf]
  %v745 = vld [vmem:[%s11] sm:$0x1]
  %v747 = vperm.slane %v745, 0
  %v761 = vunpack.c.l.b16 %v733
  %v762 = vunpack.c.l.b16 %v734
  %v763 = vunpack.c.l.b16 %v735
  %v764 = vunpack.c.l.b16 %v736
  %v765 = vunpack.c.l.b16 %v737
  %v766 = vunpack.c.l.b16 %v738
  %v767 = vunpack.c.l.b16 %v739
  %v768 = vunpack.c.l.b16 %v740
  %v769 = vunpack.c.l.b16 %v741
  %v770 = vunpack.c.l.b16 %v742
  %v771 = vunpack.c.l.b16 %v743
  %v772 = vunpack.c.l.b16 %v744
  %v773 = vpack.c.b16 %v762, %v761
  %v774 = vpack.c.b16 %v764, %v763
  %v775 = vpack.c.b16 %v766, %v765
  %v776 = vpack.c.b16 %v768, %v767
  %v777 = vpack.c.b16 %v770, %v769
  %v778 = vpack.c.b16 %v772, %v771
  %v786 = vsel %vm307, %v730, 0
  %v789 = vsel %vm307, %v731, 0
  %v792 = vsel %vm307, %v732, 0
  %794 = vmatpush.bf16.msra.mxu0 0
  %795 = vmatpush.bf16.msra.mxu0 0
  %796 = vmatpush.bf16.msra.mxu0 %v778
  %797 = vmatpush.bf16.msra.mxu0 %v777
  %798 = vmatpush.bf16.msra.mxu0 %v776
  %799 = vmatpush.bf16.msra.mxu0 %v775
  %800 = vmatpush.bf16.msra.mxu0 %v774
  %801 = vmatpush.bf16.msra.mxu0 %v773
  %802 = vmatmul.bf16.gmra.mxu0 %v786
  %v803 = vpop.f32.mrf.mxu0
  %v804 = vadd.f32 %v747, %v803
  %v805 = vpop.f32.mrf.mxu0
  %v806 = vadd.f32 %v747, %v805
  %807 = vmatmul.bf16.gmra.mxu0 %v789
  %v808 = vpop.f32.mrf.mxu0
  %v809 = vadd.f32 %v747, %v808
  %v810 = vpop.f32.mrf.mxu0
  %v811 = vadd.f32 %v747, %v810
  %812 = vmatmul.bf16.gmra.mxu0 %v792
  %v813 = vpop.f32.mrf.mxu0
  %v814 = vadd.f32 %v747, %v813
  %v815 = vpop.f32.mrf.mxu0
  %v816 = vadd.f32 %v747, %v815
  %817 = vdwg.mxu0
  %v818 = vld [vmem:[%s12] sm:$0x3]
  %820 = vset.pattern.permute.xlu0 1
  %821 = vperm.xlu0 %820, %v804
  %v822 = vpop.permute.xlu0 %821
  %825 = vset.pattern.permute.xlu0 1
  %826 = vperm.xlu0 %825, %v806
  %v827 = vpop.permute.xlu0 %826
  %830 = vset.pattern.permute.xlu0 1
  %831 = vperm.xlu0 %830, %v809
  %v832 = vpop.permute.xlu0 %831
  %835 = vset.pattern.permute.xlu0 1
  %836 = vperm.xlu0 %835, %v811
  %v837 = vpop.permute.xlu0 %836
  %840 = vset.pattern.permute.xlu0 1
  %841 = vperm.xlu0 %840, %v814
  %v842 = vpop.permute.xlu0 %841
  %845 = vset.pattern.permute.xlu0 1
  %846 = vperm.xlu0 %845, %v816
  %v847 = vpop.permute.xlu0 %846
  %v849 = vperm.slane %v818, 0
  %v850 = vmul.f32 %v822, %v849
  %v851 = vmul.f32 %v827, %v849
  %v852 = vmul.f32 %v832, %v849
  %v853 = vmul.f32 %v837, %v849
  %v854 = vmul.f32 %v842, %v849
  %v855 = vmul.f32 %v847, %v849
  %v856 = vadd.f32 %v536, %v850
  %v857 = vadd.f32 %v537, %v851
  %v858 = vadd.f32 %v538, %v852
  %v859 = vadd.f32 %v539, %v853
  %v860 = vadd.f32 %v540, %v854
  %v861 = vadd.f32 %v541, %v855
  %862 = vset.pattern.permute.xlu0 2
  %863 = vperm.xlu0 %862, %v804
  %v864 = vpop.permute.xlu0 %863
  %866 = vset.pattern.permute.xlu0 2
  %867 = vperm.xlu0 %866, %v806
  %v868 = vpop.permute.xlu0 %867
  %870 = vset.pattern.permute.xlu0 2
  %871 = vperm.xlu0 %870, %v809
  %v872 = vpop.permute.xlu0 %871
  %874 = vset.pattern.permute.xlu0 2
  %875 = vperm.xlu0 %874, %v811
  %v876 = vpop.permute.xlu0 %875
  %878 = vset.pattern.permute.xlu0 2
  %879 = vperm.xlu0 %878, %v814
  %v880 = vpop.permute.xlu0 %879
  %882 = vset.pattern.permute.xlu0 2
  %883 = vperm.xlu0 %882, %v816
  %v884 = vpop.permute.xlu0 %883
  %v886 = vperm.slane %v818, 1
  %v887 = vmul.f32 %v864, %v886
  %v888 = vmul.f32 %v868, %v886
  %v889 = vmul.f32 %v872, %v886
  %v890 = vmul.f32 %v876, %v886
  %v891 = vmul.f32 %v880, %v886
  %v892 = vmul.f32 %v884, %v886
  %v893 = vadd.f32 %v856, %v887
  %v894 = vadd.f32 %v857, %v888
  %v895 = vadd.f32 %v858, %v889
  %v896 = vadd.f32 %v859, %v890
  %v897 = vadd.f32 %v860, %v891
  %v898 = vadd.f32 %v861, %v892
  %v899 = vld [vmem:[%s13] sm:$0x1]
  %v901 = vperm.slane %v899, 0
  %v903 = vadd.f32 %v893, %v901
  %v904 = vadd.f32 %v894, %v901
  %v905 = vadd.f32 %v895, %v901
  %v906 = vadd.f32 %v896, %v901
  %v907 = vadd.f32 %v897, %v901
  %v908 = vadd.f32 %v898, %v901
  %v909 = vpack.c.bf16 %v903, %v903
  %v910 = vpack.c.bf16 %v904, %v904
  %v911 = vpack.c.bf16 %v905, %v905
  %v912 = vpack.c.bf16 %v906, %v906
  %v913 = vpack.c.bf16 %v907, %v907
  %v914 = vpack.c.bf16 %v908, %v908
  %vm915 = vcmask 257024
  %916 = vst.msk [vmem:[%s14] sm:$0xf] %vm915, %v909
  %917 = vst.msk [vmem:[%s14 + $0x4] sm:$0xf] %vm915, %v910
  %918 = vst.msk [vmem:[%s14 + $0x8] sm:$0xf] %vm915, %v911
  %919 = vst.msk [vmem:[%s14 + $0xc] sm:$0xf] %vm915, %v912
  %920 = vst.msk [vmem:[%s14 + $0x10] sm:$0xf] %vm915, %v913
  %vm921 = vcmask 257024
  %vm922 = vsmask.f32 3328
  %vm923 = vmand %vm921, %vm922
  %v924 = vld [vmem:[%s14 + $0x14] sm:$0xf]
  %v925 = vsel %vm923, %v914, %v924
  %926 = vst [vmem:[%s14 + $0x14] sm:$0xf] %v925
  %vm927 = vcmask 23552
  %928 = vst.msk [vmem:[%s15] sm:$0xff] %vm927, %v804
  %929 = vst.msk [vmem:[%s15 + $0x8] sm:$0xff] %vm927, %v806
  %930 = vst.msk [vmem:[%s15 + $0x10] sm:$0xff] %vm927, %v809
  %931 = vst.msk [vmem:[%s15 + $0x18] sm:$0xff] %vm927, %v811
  %932 = vst.msk [vmem:[%s15 + $0x20] sm:$0xff] %vm927, %v814
  %vm933 = vcmask 22528
  %934 = vst.msk [vmem:[%s15 + $0x28] sm:$0x7f] %vm933, %v816
  // Predicated region
  $region58: #{_fs2_encode.1} parent=0 // pred_check
    _
  $region59: #{_fs2_encode.1} parent=0 // pred_check_branch
    %936 = sbr.rel (0) target = $region61
  $region60: #{_fs2_encode.1} parent=0 // pred_region
    _
  $region61: #{_fs2_encode.1} parent=0 // pred_fallthru
    _
  // Predicated region
  $region62: #{_fs2_encode.1} parent=0 // pred_check
    _
  $region63: #{_fs2_encode.1} parent=0 // pred_check_branch
    %938 = sbr.rel (0) target = $region65
  $region64: #{_fs2_encode.1} parent=0 // pred_region
    _
  $region65: #{_fs2_encode.1} parent=0 // pred_fallthru
    _
  // Predicated region
  $region66: #{_fs2_encode.1} parent=0 // pred_check
    _
  $region67: #{_fs2_encode.1} parent=0 // pred_check_branch
    %940 = sbr.rel (0) target = $region69
  $region68: #{_fs2_encode.1} parent=0 // pred_region
    _
  $region69: #{_fs2_encode.1} parent=0 // pred_fallthru
    _
  // Predicated region
  $region70: #{_fs2_encode.1} parent=0 // pred_check
    _
  $region71: #{_fs2_encode.1} parent=0 // pred_check_branch
    %942 = sbr.rel (0) target = $region73
  $region72: #{_fs2_encode.1} parent=0 // pred_region
    _
  $region73: #{_fs2_encode.1} parent=0 // pred_fallthru
    _

</llo_original>
